<compile_context>
chip_gen: v6e
topology: v6e:2x2x1
jax: 0.10.0
libtpu: 0.0.40
codegen_flags: <defaults>
</compile_context>

<pallas_src>
import functools

import jax
import jax.numpy as jnp
from jax.experimental import pallas as pl
from jax.experimental.pallas import tpu as pltpu


def _round_up(x, m):
    return (x + m - 1) // m * m


def _softmax_loss_kernel(x_ref, w_ref, b_ref, lab_ref,      # inputs
                         loss_ref, corr_ref,                 # outputs (per-sample)
                         m_ref, l_ref, tgt_ref, idx_ref,     # VMEM scratch
                         *, n_class):
    c = pl.program_id(1)
    nc = pl.num_programs(1)

    # --- init online-LSE / argmax state at the first class tile -------------
    @pl.when(c == 0)
    def _():
        m_ref[...] = jnp.full_like(m_ref, -jnp.inf)
        l_ref[...] = jnp.zeros_like(l_ref)
        tgt_ref[...] = jnp.zeros_like(tgt_ref)
        idx_ref[...] = jnp.zeros_like(idx_ref)

    # --- fc(x) for this (batch-tile, class-tile): MXU, f32 accumulate -------
    x = x_ref[...]                       # [TM, E]   (native dtype, e.g. bf16/f32)
    w = w_ref[...]                       # [TC, E]   (PyTorch [C, E] layout tile)
    logits = jax.lax.dot_general(
        x, w,
        dimension_numbers=(((1,), (1,)), ((), ())),          # contract E with E
        preferred_element_type=jnp.float32)                  # [TM, TC] f32
    logits = logits + b_ref[...].astype(jnp.float32)         # bias [1, TC]

    tm, tc = logits.shape
    col = jax.lax.broadcasted_iota(jnp.int32, (tm, tc), 1) + c * tc   # global col
    valid = col < n_class
    logits = jnp.where(valid, logits, -jnp.inf)               # mask padded classes

    labels = lab_ref[...]                                     # [TM, 1] int32

    # target logit (label lies in exactly one class tile; select-based, no onehot)
    tgt_ref[...] = tgt_ref[...] + jnp.sum(
        jnp.where(col == labels, logits, 0.0), axis=-1, keepdims=True)

    # per-tile max / first-index argmax
    tile_max = jnp.max(logits, axis=-1, keepdims=True)        # [TM, 1]
    tile_arg = jnp.min(
        jnp.where(logits >= tile_max, col, jnp.int32(2147483647)),
        axis=-1, keepdims=True)                               # [TM, 1]

    # online log-sum-exp update + running argmax (strict > keeps first index)
    m_old = m_ref[...]
    m_new = jnp.maximum(m_old, tile_max)
    l_ref[...] = l_ref[...] * jnp.exp(m_old - m_new) + jnp.sum(
        jnp.exp(logits - m_new), axis=-1, keepdims=True)
    idx_ref[...] = jnp.where(tile_max > m_old, tile_arg, idx_ref[...])
    m_ref[...] = m_new

    # --- finalize at the last class tile -------------------------------------
    @pl.when(c == nc - 1)
    def _():
        lse = m_ref[...] + jnp.log(l_ref[...])                # [TM, 1]
        per_sample_loss = lse - tgt_ref[...]                  # CE per sample
        correct = (idx_ref[...] == labels).astype(jnp.float32)
        loss_ref[...] = jnp.broadcast_to(per_sample_loss, loss_ref.shape)
        corr_ref[...] = jnp.broadcast_to(correct, corr_ref.shape)


def softmax_forward(x, weight, bias, label, *, tm=None, tc=None):
    """x: [B, E], weight: [C, E] (PyTorch nn.Linear layout), bias: [C], label: [B] int.

    Returns (mean cross-entropy loss, top-1 accuracy in percent).
    """
    B, E = x.shape
    C = weight.shape[0]
    assert weight.shape[1] == E

    # Tile sizes: lane-dense / MXU-friendly (class tile multiple of 128, batch
    # tile multiple of 8), capped so double-buffered weight tiles stay well
    # inside VMEM on all generations (incl. v7x's 64 MiB).
    if tm is None:
        tm = min(256, _round_up(B, 8))
    if tc is None:
        tc = min(512, _round_up(C, 128))
    tm = _round_up(tm, 8)
    tc = _round_up(tc, 128)

    B_pad = _round_up(B, tm)
    C_pad = _round_up(C, tc)

    # TODO(synk): at real (10^4-10^5 class) sizes, pad weight/bias once at
    # parameter-init time instead of per forward call (this padding is demo glue).
    x_p = jnp.pad(x, ((0, B_pad - B), (0, 0)))
    w_p = jnp.pad(weight, ((0, C_pad - C), (0, 0)))           # keep [C, E] layout
    b_p = jnp.pad(bias, (0, C_pad - C)).reshape(1, C_pad)
    lab_p = jnp.pad(label.astype(jnp.int32), (0, B_pad - B),
                    constant_values=-1).reshape(B_pad, 1)

    nb = B_pad // tm
    nc = C_pad // tc

    kernel = functools.partial(_softmax_loss_kernel, n_class=C)

    bytes_in = int(x_p.size * x_p.dtype.itemsize
                   + nb * w_p.size * w_p.dtype.itemsize      # weight re-streamed per batch tile
                   + nb * b_p.size * b_p.dtype.itemsize
                   + lab_p.size * 4)
    cost = pl.CostEstimate(
        flops=2 * B_pad * E * C_pad,
        transcendentals=B_pad * C_pad,
        bytes_accessed=bytes_in + 2 * B_pad * 128 * 4,
    )

    out_loss, out_corr = pl.pallas_call(
        kernel,
        out_shape=(jax.ShapeDtypeStruct((B_pad, 128), jnp.float32),
                   jax.ShapeDtypeStruct((B_pad, 128), jnp.float32)),
        grid_spec=pltpu.PrefetchScalarGridSpec(
            num_scalar_prefetch=0,
            grid=(nb, nc),                                      # (batch, class=reduction)
            in_specs=[
                pl.BlockSpec((tm, E), lambda b, c: (b, 0)),     # x tile
                pl.BlockSpec((tc, E), lambda b, c: (c, 0)),     # weight tile [TC, E]
                pl.BlockSpec((1, tc), lambda b, c: (0, c)),     # bias tile
                pl.BlockSpec((tm, 1), lambda b, c: (b, 0)),     # labels
            ],
            out_specs=(
                pl.BlockSpec((tm, 128), lambda b, c: (b, 0)),   # per-sample loss
                pl.BlockSpec((tm, 128), lambda b, c: (b, 0)),   # per-sample correct
            ),
            scratch_shapes=[
                pltpu.VMEM((tm, 1), jnp.float32),   # running max  m
                pltpu.VMEM((tm, 1), jnp.float32),   # running sumexp l
                pltpu.VMEM((tm, 1), jnp.float32),   # target logit
                pltpu.VMEM((tm, 1), jnp.int32),     # running argmax index
            ],
        ),
        compiler_params=pltpu.CompilerParams(
            dimension_semantics=("parallel", "arbitrary")),
        cost_estimate=cost,
    )(x_p, w_p, b_p, lab_p)

    loss = jnp.mean(out_loss[:B, 0])
    prec1 = jnp.mean(out_corr[:B, 0]) * 100.0
    return loss, prec1


def _reference(x, weight, bias, label):
    logits = x @ weight.T + bias
    lse = jax.scipy.special.logsumexp(logits, axis=-1)
    tgt = jnp.take_along_axis(logits, label[:, None], axis=-1)[:, 0]
    loss = jnp.mean(lse - tgt)
    prec = jnp.mean((jnp.argmax(logits, axis=-1) == label).astype(jnp.float32)) * 100.0
    return loss, prec


def _check(B, E, C, key, **kw):
    kx, kw_, kb, kl = jax.random.split(key, 4)
    x = jax.random.normal(kx, (B, E), dtype=jnp.float32)
    bound = 1.0 / (E ** 0.5)           # deterministic nn.Linear-style init
    weight = jax.random.uniform(kw_, (C, E), minval=-bound, maxval=bound,
                                dtype=jnp.float32)
    bias = jax.random.uniform(kb, (C,), minval=-bound, maxval=bound,
                              dtype=jnp.float32)
    label = jax.random.randint(kl, (B,), 0, C, dtype=jnp.int32)

    loss, prec1 = softmax_forward(x, weight, bias, label, **kw)
    jax.block_until_ready((loss, prec1))

    ref_loss, ref_prec = _reference(x, weight, bias, label)
    assert jnp.allclose(loss, ref_loss, rtol=1e-4, atol=1e-4), (loss, ref_loss)
    assert jnp.allclose(prec1, ref_prec, rtol=1e-4, atol=1e-4), (prec1, ref_prec)


if __name__ == "__main__":
    key = jax.random.PRNGKey(0)
    k1, k2 = jax.random.split(key)

    # Multi-tile case: exercises online LSE / argmax across 3 class tiles,
    # class padding (300 -> 384) and batch padding (20 -> 24, 3 batch tiles).
    _check(B=20, E=96, C=300, key=k1, tm=8, tc=128)

    # Original toy case (single class tile with heavy column padding).
    _check(B=8, E=32, C=16, key=k2)

    print("KERNEL_OK")
</pallas_src>

<mosaic_0001>
module attributes {stable_mosaic.version = 11 : i64} {
  func.func @_softmax_loss_kernel(%arg0: i32, %arg1: i32, %arg2: memref<8x96xf32, #tpu.memory_space<vmem>>, %arg3: memref<128x96xf32, #tpu.memory_space<vmem>>, %arg4: memref<1x128xf32, #tpu.memory_space<vmem>>, %arg5: memref<8x1xi32, #tpu.memory_space<vmem>>, %arg6: memref<8x128xf32, #tpu.memory_space<vmem>>, %arg7: memref<8x128xf32, #tpu.memory_space<vmem>>, %arg8: memref<8x1xf32, #tpu.memory_space<vmem>>, %arg9: memref<8x1xf32, #tpu.memory_space<vmem>>, %arg10: memref<8x1xf32, #tpu.memory_space<vmem>>, %arg11: memref<8x1xi32, #tpu.memory_space<vmem>>) attributes {dimension_semantics = [#tpu.dimension_semantics<parallel>, #tpu.dimension_semantics<arbitrary>], iteration_bounds = array<i64: 3, 3>, scalar_prefetch = 0 : i64, scratch_operands = 4 : i64, tpu.core_type = #tpu.core_type<tc>, window_params = [{transform_indices = @transform_0, window_bounds = array<i64: 8, 96>}, {transform_indices = @transform_1, window_bounds = array<i64: 128, 96>}, {transform_indices = @transform_2, window_bounds = array<i64: 1, 128>}, {transform_indices = @transform_3, window_bounds = array<i64: 8, 1>}, {transform_indices = @transform_4, window_bounds = array<i64: 8, 128>}, {transform_indices = @transform_5, window_bounds = array<i64: 8, 128>}]} {
    %c0_i32 = arith.constant 0 : i32
    %0 = arith.cmpi eq, %arg1, %c0_i32 : i32
    %1 = arith.extui %0 : i1 to i32
    %c0_i32_0 = arith.constant 0 : i32
    %2 = arith.cmpi ne, %1, %c0_i32_0 : i32
    scf.if %2 {
      %cst_31 = arith.constant 0xFF800000 : f32
      %56 = vector.broadcast %cst_31 : f32 to vector<8x1xf32>
      %c0_32 = arith.constant 0 : index
      %c0_33 = arith.constant 0 : index
      %57 = vector.load %arg8[%c0_32, %c0_33] : memref<8x1xf32, #tpu.memory_space<vmem>>, vector<8x1xf32>
      tpu.vector_store %arg8[%c0_32, %c0_33], %56 {strides = array<i32>} : memref<8x1xf32, #tpu.memory_space<vmem>>, vector<8x1xf32>,
      %cst_34 = arith.constant 0.000000e+00 : f32
      %58 = vector.broadcast %cst_34 : f32 to vector<8x1xf32>
      %c0_35 = arith.constant 0 : index
      %c0_36 = arith.constant 0 : index
      %59 = vector.load %arg9[%c0_35, %c0_36] : memref<8x1xf32, #tpu.memory_space<vmem>>, vector<8x1xf32>
      tpu.vector_store %arg9[%c0_35, %c0_36], %58 {strides = array<i32>} : memref<8x1xf32, #tpu.memory_space<vmem>>, vector<8x1xf32>,
      %cst_37 = arith.constant 0.000000e+00 : f32
      %60 = vector.broadcast %cst_37 : f32 to vector<8x1xf32>
      %c0_38 = arith.constant 0 : index
      %c0_39 = arith.constant 0 : index
      %61 = vector.load %arg10[%c0_38, %c0_39] : memref<8x1xf32, #tpu.memory_space<vmem>>, vector<8x1xf32>
      tpu.vector_store %arg10[%c0_38, %c0_39], %60 {strides = array<i32>} : memref<8x1xf32, #tpu.memory_space<vmem>>, vector<8x1xf32>,
      %c0_i32_40 = arith.constant 0 : i32
      %62 = vector.broadcast %c0_i32_40 : i32 to vector<8x1xi32>
      %c0_41 = arith.constant 0 : index
      %c0_42 = arith.constant 0 : index
      %63 = vector.load %arg11[%c0_41, %c0_42] : memref<8x1xi32, #tpu.memory_space<vmem>>, vector<8x1xi32>
      tpu.vector_store %arg11[%c0_41, %c0_42], %62 {strides = array<i32>} : memref<8x1xi32, #tpu.memory_space<vmem>>, vector<8x1xi32>,
    } else {
    }
    %c0 = arith.constant 0 : index
    %c0_1 = arith.constant 0 : index
    %3 = vector.load %arg2[%c0, %c0_1] : memref<8x96xf32, #tpu.memory_space<vmem>>, vector<8x96xf32>
    %c0_2 = arith.constant 0 : index
    %c0_3 = arith.constant 0 : index
    %4 = vector.load %arg3[%c0_2, %c0_3] : memref<128x96xf32, #tpu.memory_space<vmem>>, vector<128x96xf32>
    %cst = arith.constant dense<0.000000e+00> : vector<8x128xf32>
    %5 = tpu.matmul %3, %4, %cst {dimension_numbers = #tpu.dot_dimension_numbers<[1], [1], [0], [0], [0, 0, 1, 0], [], []>} : vector<8x96xf32>, vector<128x96xf32>, vector<8x128xf32> -> vector<8x128xf32>
    %c0_4 = arith.constant 0 : index
    %c0_5 = arith.constant 0 : index
    %6 = vector.load %arg4[%c0_4, %c0_5] : memref<1x128xf32, #tpu.memory_space<vmem>>, vector<1x128xf32>
    %7 = vector.broadcast %6 : vector<1x128xf32> to vector<8x128xf32>
    %8 = arith.addf %5, %7 : vector<8x128xf32>
    %9 = tpu.iota {dimensions = array<i32: 1>} : vector<8x128xi32>
    %c128_i32 = arith.constant 128 : i32
    %10 = arith.muli %arg1, %c128_i32 : i32
    %11 = vector.broadcast %10 : i32 to vector<8x128xi32>
    %12 = arith.addi %9, %11 : vector<8x128xi32>
    %c300_i32 = arith.constant 300 : i32
    %13 = vector.broadcast %c300_i32 : i32 to vector<8x128xi32>
    %14 = arith.cmpi slt, %12, %13 : vector<8x128xi32>
    %cst_6 = arith.constant 0xFF800000 : f32
    %15 = vector.broadcast %cst_6 : f32 to vector<8x128xf32>
    %16 = arith.select %14, %8, %15 : vector<8x128xi1>, vector<8x128xf32>
    %c0_7 = arith.constant 0 : index
    %c0_8 = arith.constant 0 : index
    %17 = vector.load %arg5[%c0_7, %c0_8] : memref<8x1xi32, #tpu.memory_space<vmem>>, vector<8x1xi32>
    %c0_9 = arith.constant 0 : index
    %c0_10 = arith.constant 0 : index
    %18 = vector.load %arg10[%c0_9, %c0_10] : memref<8x1xf32, #tpu.memory_space<vmem>>, vector<8x1xf32>
    %19 = vector.broadcast %17 : vector<8x1xi32> to vector<8x128xi32>
    %20 = arith.cmpi eq, %12, %19 : vector<8x128xi32>
    %cst_11 = arith.constant 0.000000e+00 : f32
    %21 = vector.broadcast %cst_11 : f32 to vector<8x128xf32>
    %22 = arith.select %20, %16, %21 : vector<8x128xi1>, vector<8x128xf32>
    %cst_12 = arith.constant dense<0.000000e+00> : vector<8xf32>
    %23 = vector.multi_reduction <add>, %22, %cst_12 [1] : vector<8x128xf32> to vector<8xf32>
    %24 = vector.shape_cast %23 : vector<8xf32> to vector<8x1xf32>
    %25 = arith.addf %18, %24 : vector<8x1xf32>
    %c0_13 = arith.constant 0 : index
    %c0_14 = arith.constant 0 : index
    %26 = vector.load %arg10[%c0_13, %c0_14] : memref<8x1xf32, #tpu.memory_space<vmem>>, vector<8x1xf32>
    tpu.vector_store %arg10[%c0_13, %c0_14], %25 {strides = array<i32>} : memref<8x1xf32, #tpu.memory_space<vmem>>, vector<8x1xf32>,
    %cst_15 = arith.constant dense<0xFF800000> : vector<8xf32>
    %27 = vector.multi_reduction <maximumf>, %16, %cst_15 [1] : vector<8x128xf32> to vector<8xf32>
    %28 = vector.shape_cast %27 : vector<8xf32> to vector<8x1xf32>
    %29 = vector.broadcast %28 : vector<8x1xf32> to vector<8x128xf32>
    %30 = arith.cmpf oge, %16, %29 : vector<8x128xf32>
    %c2147483647_i32 = arith.constant 2147483647 : i32
    %31 = vector.broadcast %c2147483647_i32 : i32 to vector<8x128xi32>
    %32 = arith.select %30, %12, %31 : vector<8x128xi1>, vector<8x128xi32>
    %cst_16 = arith.constant dense<2147483647> : vector<8xi32>
    %33 = vector.multi_reduction <minsi>, %32, %cst_16 [1] : vector<8x128xi32> to vector<8xi32>
    %34 = vector.shape_cast %33 : vector<8xi32> to vector<8x1xi32>
    %c0_17 = arith.constant 0 : index
    %c0_18 = arith.constant 0 : index
    %35 = vector.load %arg8[%c0_17, %c0_18] : memref<8x1xf32, #tpu.memory_space<vmem>>, vector<8x1xf32>
    %36 = arith.maximumf %35, %28 : vector<8x1xf32>
    %c0_19 = arith.constant 0 : index
    %c0_20 = arith.constant 0 : index
    %37 = vector.load %arg9[%c0_19, %c0_20] : memref<8x1xf32, #tpu.memory_space<vmem>>, vector<8x1xf32>
    %38 = arith.subf %35, %36 : vector<8x1xf32>
    %39 = math.exp %38 : vector<8x1xf32>
    %40 = arith.mulf %37, %39 : vector<8x1xf32>
    %41 = vector.broadcast %36 : vector<8x1xf32> to vector<8x128xf32>
    %42 = arith.subf %16, %41 : vector<8x128xf32>
    %43 = math.exp %42 : vector<8x128xf32>
    %cst_21 = arith.constant dense<0.000000e+00> : vector<8xf32>
    %44 = vector.multi_reduction <add>, %43, %cst_21 [1] : vector<8x128xf32> to vector<8xf32>
    %45 = vector.shape_cast %44 : vector<8xf32> to vector<8x1xf32>
    %46 = arith.addf %40, %45 : vector<8x1xf32>
    %c0_22 = arith.constant 0 : index
    %c0_23 = arith.constant 0 : index
    %47 = vector.load %arg9[%c0_22, %c0_23] : memref<8x1xf32, #tpu.memory_space<vmem>>, vector<8x1xf32>
    tpu.vector_store %arg9[%c0_22, %c0_23], %46 {strides = array<i32>} : memref<8x1xf32, #tpu.memory_space<vmem>>, vector<8x1xf32>,
    %48 = arith.cmpf ogt, %28, %35 : vector<8x1xf32>
    %c0_24 = arith.constant 0 : index
    %c0_25 = arith.constant 0 : index
    %49 = vector.load %arg11[%c0_24, %c0_25] : memref<8x1xi32, #tpu.memory_space<vmem>>, vector<8x1xi32>
    %50 = arith.select %48, %34, %49 : vector<8x1xi1>, vector<8x1xi32>
    %c0_26 = arith.constant 0 : index
    %c0_27 = arith.constant 0 : index
    %51 = vector.load %arg11[%c0_26, %c0_27] : memref<8x1xi32, #tpu.memory_space<vmem>>, vector<8x1xi32>
    tpu.vector_store %arg11[%c0_26, %c0_27], %50 {strides = array<i32>} : memref<8x1xi32, #tpu.memory_space<vmem>>, vector<8x1xi32>,
    %c0_28 = arith.constant 0 : index
    %c0_29 = arith.constant 0 : index
    %52 = vector.load %arg8[%c0_28, %c0_29] : memref<8x1xf32, #tpu.memory_space<vmem>>, vector<8x1xf32>
    tpu.vector_store %arg8[%c0_28, %c0_29], %36 {strides = array<i32>} : memref<8x1xf32, #tpu.memory_space<vmem>>, vector<8x1xf32>,
    %c2_i32 = arith.constant 2 : i32
    %53 = arith.cmpi eq, %arg1, %c2_i32 : i32
    %54 = arith.extui %53 : i1 to i32
    %c0_i32_30 = arith.constant 0 : i32
    %55 = arith.cmpi ne, %54, %c0_i32_30 : i32
    scf.if %55 {
      %c0_31 = arith.constant 0 : index
      %c0_32 = arith.constant 0 : index
      %56 = vector.load %arg8[%c0_31, %c0_32] : memref<8x1xf32, #tpu.memory_space<vmem>>, vector<8x1xf32>
      %c0_33 = arith.constant 0 : index
      %c0_34 = arith.constant 0 : index
      %57 = vector.load %arg9[%c0_33, %c0_34] : memref<8x1xf32, #tpu.memory_space<vmem>>, vector<8x1xf32>
      %58 = math.log %57 : vector<8x1xf32>
      %59 = arith.addf %56, %58 : vector<8x1xf32>
      %c0_35 = arith.constant 0 : index
      %c0_36 = arith.constant 0 : index
      %60 = vector.load %arg10[%c0_35, %c0_36] : memref<8x1xf32, #tpu.memory_space<vmem>>, vector<8x1xf32>
      %61 = arith.subf %59, %60 : vector<8x1xf32>
      %c0_37 = arith.constant 0 : index
      %c0_38 = arith.constant 0 : index
      %62 = vector.load %arg11[%c0_37, %c0_38] : memref<8x1xi32, #tpu.memory_space<vmem>>, vector<8x1xi32>
      %63 = arith.cmpi eq, %62, %17 : vector<8x1xi32>
      %64 = arith.extui %63 : vector<8x1xi1> to vector<8x1xi32>
      %65 = arith.sitofp %64 : vector<8x1xi32> to vector<8x1xf32>
      %66 = vector.shape_cast %61 : vector<8x1xf32> to vector<8x1xf32>
      %67 = vector.broadcast %66 : vector<8x1xf32> to vector<8x128xf32>
      %c0_39 = arith.constant 0 : index
      %c0_40 = arith.constant 0 : index
      %68 = vector.load %arg6[%c0_39, %c0_40] : memref<8x128xf32, #tpu.memory_space<vmem>>, vector<8x128xf32>
      tpu.vector_store %arg6[%c0_39, %c0_40], %67 {strides = array<i32>} : memref<8x128xf32, #tpu.memory_space<vmem>>, vector<8x128xf32>,
      %69 = vector.shape_cast %65 : vector<8x1xf32> to vector<8x1xf32>
      %70 = vector.broadcast %69 : vector<8x1xf32> to vector<8x128xf32>
      %c0_41 = arith.constant 0 : index
      %c0_42 = arith.constant 0 : index
      %71 = vector.load %arg7[%c0_41, %c0_42] : memref<8x128xf32, #tpu.memory_space<vmem>>, vector<8x128xf32>
      tpu.vector_store %arg7[%c0_41, %c0_42], %70 {strides = array<i32>} : memref<8x128xf32, #tpu.memory_space<vmem>>, vector<8x128xf32>,
    } else {
    }
    return
  }
  func.func @transform_0(%arg0: i32, %arg1: i32) -> (i32, i32) {
    %c0_i32 = arith.constant 0 : i32
    %c0_i32_0 = arith.constant 0 : i32
    return %arg0, %c0_i32 : i32, i32
  }
  func.func @transform_1(%arg0: i32, %arg1: i32) -> (i32, i32) {
    %c0_i32 = arith.constant 0 : i32
    %c0_i32_0 = arith.constant 0 : i32
    return %arg1, %c0_i32 : i32, i32
  }
  func.func @transform_2(%arg0: i32, %arg1: i32) -> (i32, i32) {
    %c0_i32 = arith.constant 0 : i32
    %c0_i32_0 = arith.constant 0 : i32
    return %c0_i32, %arg1 : i32, i32
  }
  func.func @transform_3(%arg0: i32, %arg1: i32) -> (i32, i32) {
    %c0_i32 = arith.constant 0 : i32
    %c0_i32_0 = arith.constant 0 : i32
    return %arg0, %c0_i32 : i32, i32
  }
  func.func @transform_4(%arg0: i32, %arg1: i32) -> (i32, i32) {
    %c0_i32 = arith.constant 0 : i32
    %c0_i32_0 = arith.constant 0 : i32
    return %arg0, %c0_i32 : i32, i32
  }
  func.func @transform_5(%arg0: i32, %arg1: i32) -> (i32, i32) {
    %c0_i32 = arith.constant 0 : i32
    %c0_i32_0 = arith.constant 0 : i32
    return %arg0, %c0_i32 : i32, i32
  }
}

</mosaic_0001>

<llo_original>
// kernel: tpu_custom_call.1
$region0: #{tpu_custom_call.1}
  #allocation0 [shape = 'u32[]', space=smem, size = 0x4, offset = 0x4, fixed_abs, tag = 'smem constant byte address 0x4 - core index']
  #allocation1 [shape = 'u32[144,128]{1,0:T(1,128)}', space=vmem, size = 0x12000, scoped, tag = 'internal scratch']
  #allocation2 [shape = 'f32[8,1]{1,0:T(8,128)}', space=vmem, size = 0x1000, scoped, tag = 'scratch operand']
  #allocation3 [shape = 'f32[8,1]{1,0:T(8,128)}', space=vmem, size = 0x1000, scoped, tag = 'scratch operand']
  #allocation4 [shape = 'f32[8,1]{1,0:T(8,128)}', space=vmem, size = 0x1000, scoped, tag = 'scratch operand']
  #allocation5 [shape = 's32[8,1]{1,0:T(8,128)}', space=vmem, size = 0x1000, scoped, tag = 'scratch operand']
  %s0 = inlined_call_operand.vmem [shape: f32[24,96], index: 0, kind: input, shape index: {}]
  %s1 = inlined_call_operand.vmem [shape: f32[384,96], index: 1, kind: input, shape index: {}]
  %s2 = inlined_call_operand.vmem [shape: f32[1,384], index: 2, kind: input, shape index: {}]
  %s3 = inlined_call_operand.vmem [shape: s32[24,1], index: 3, kind: input, shape index: {}]
  %s4 = inlined_call_operand.hbm [shape: f32[24,128], index: 4, kind: output, shape index: {0}]
  %s5 = inlined_call_operand.hbm [shape: f32[24,128], index: 5, kind: output, shape index: {1}]
  %6 = xla_tuple %s4, %s5
  %s7 = sld [smem:[#allocation0]]
  $region65: #{tpu_custom_call.1} parent=0
    _
  %s9 = ssub.s32 1, %s7
  %s10 = scalar_select 0, %s9, %s7
  $region1: #{tpu_custom_call.1} parent=0
    #allocation6 [shape = 'u8[8192]{0}', space=vmem, size = 0x2000, scoped, tag = 'output window, operand 0']
    #allocation7 [shape = 's32[2]{0}', space=sflag, size = 0x8, scoped, tag = 'scoped memory for tpu_custom_call.1']
    #allocation8 [shape = 'u8[8192]{0}', space=vmem, size = 0x2000, scoped, tag = 'output window, operand 1']
    #allocation9 [shape = 's32[2]{0}', space=sflag, size = 0x8, scoped, tag = 'scoped memory for tpu_custom_call.1']
    %11 = vsyncpa [#allocation7], 0
    %s12 = scalar_lea.sflag [#allocation7], 1
    %13 = vsyncpa %s12, 0
    %14 = vsyncpa [#allocation9], 0
    %s15 = scalar_lea.sflag [#allocation9], 1
    %16 = vsyncpa %s15, 0
    loop: start=0, step=1, limit=11
    $region2: #{tpu_custom_call.1} parent=1 // loop_pre_header
      _
    $region3: #{tpu_custom_call.1} parent=1 // loop_header
      %s18 = sphi 0, %s22
      %p19 = scmp.ge.s32.totalorder %s18, 11
      %s25 = sphi 0, %s37
      %s26 = sphi 0, %s33
      %s27 = sphi 0, %s25
      %s28 = sphi 0, %s26
      %s29 = sphi 0, %s27
      %s30 = sphi 0, %s28
      %s40 = sphi 0, %s42
      %s43 = sphi 0, %s40
      %s44 = sphi 0, %s43
      %s60 = sphi 0, %s44
      %s66 = sphi 0, %s68
      %s69 = sphi 0, %s66
      %s70 = sphi 0, %s69
      %s86 = sphi 0, %s70
      %s92 = sphi 0, %s94
      %s95 = sphi 0, %s92
      %s96 = sphi 0, %s95
      %s112 = sphi 0, %s96
      %s118 = sphi 0, %s120
      %s121 = sphi 0, %s118
      %s122 = sphi 0, %s121
      %s138 = sphi 0, %s122
      %s144 = sphi 0, %s146
      %s147 = sphi 0, %s144
      %s148 = sphi 0, %s147
      %s164 = sphi 0, %s148
      %s170 = sphi 0, %s172
      %s173 = sphi 0, %s170
      %s174 = sphi 0, %s173
      %s190 = sphi 0, %s174
    $region4: #{tpu_custom_call.1} parent=1 // loop_header_branch
      %21 = sbr.rel (%p19) target = $region8
    $region5: #{tpu_custom_call.1} parent=1 // loop_body
      %s23 = ssub.s32 %s18, 1
      %s24 = ssub.s32 %s18, 2
      %s31 = sadd.s32 1, %s26
      %p32 = scmp.ge.s32.totalorder %s31, 3
      %s33 = scalar_select %p32, 0, %s31
      %s34 = sadd.s32 1, %s25
      %s35 = scalar_select %p32, %s34, %s25
      %p36 = scmp.ge.s32.totalorder %s35, 3
      %s37 = scalar_select %p36, 0, %s35
      %s38 = ssub.s32 %s25, %s37
      %p39 = scmp.eq.s32.totalorder %s38, 0
      %s41 = sadd.s32 %s40, 1
      %s42 = scalar_select %p39, %s40, %s41
      %p45 = pneg %p39
      %p46 = scmp.eq.s32.totalorder %s18, 8
      %p47 = por %p45, %p46
      %p48 = scmp.ne.s32.totalorder %s40, %s43
      %p49 = scmp.eq.s32.totalorder %s18, 0
      %p50 = por %p48, %p49
      %p51 = scmp.ne.s32.totalorder %s40, %s43
      %p52 = scmp.eq.s32.totalorder %s23, 8
      %p53 = por %p51, %p52
      %p54 = scmp.ne.s32.totalorder %s43, %s44
      %p55 = scmp.eq.s32.totalorder %s23, 0
      %p56 = por %p54, %p55
      %p57 = scmp.ne.s32.totalorder %s43, %s44
      %p58 = scmp.eq.s32.totalorder %s24, 8
      %p59 = por %p57, %p58
      %p61 = scmp.ne.s32.totalorder %s44, %s60
      %p62 = scmp.eq.s32.totalorder %s24, 0
      %p63 = por %p61, %p62
      %s64 = ssub.s32 %s26, %s33
      %p65 = scmp.eq.s32.totalorder %s64, 0
      %s67 = sadd.s32 %s66, 1
      %s68 = scalar_select %p65, %s66, %s67
      %p71 = pneg %p65
      %p72 = scmp.eq.s32.totalorder %s18, 8
      %p73 = por %p71, %p72
      %p74 = scmp.ne.s32.totalorder %s66, %s69
      %p75 = scmp.eq.s32.totalorder %s18, 0
      %p76 = por %p74, %p75
      %p77 = scmp.ne.s32.totalorder %s66, %s69
      %p78 = scmp.eq.s32.totalorder %s23, 8
      %p79 = por %p77, %p78
      %p80 = scmp.ne.s32.totalorder %s69, %s70
      %p81 = scmp.eq.s32.totalorder %s23, 0
      %p82 = por %p80, %p81
      %p83 = scmp.ne.s32.totalorder %s69, %s70
      %p84 = scmp.eq.s32.totalorder %s24, 8
      %p85 = por %p83, %p84
      %p87 = scmp.ne.s32.totalorder %s70, %s86
      %p88 = scmp.eq.s32.totalorder %s24, 0
      %p89 = por %p87, %p88
      %s90 = ssub.s32 %s26, %s33
      %p91 = scmp.eq.s32.totalorder %s90, 0
      %s93 = sadd.s32 %s92, 1
      %s94 = scalar_select %p91, %s92, %s93
      %p97 = pneg %p91
      %p98 = scmp.eq.s32.totalorder %s18, 8
      %p99 = por %p97, %p98
      %p100 = scmp.ne.s32.totalorder %s92, %s95
      %p101 = scmp.eq.s32.totalorder %s18, 0
      %p102 = por %p100, %p101
      %p103 = scmp.ne.s32.totalorder %s92, %s95
      %p104 = scmp.eq.s32.totalorder %s23, 8
      %p105 = por %p103, %p104
      %p106 = scmp.ne.s32.totalorder %s95, %s96
      %p107 = scmp.eq.s32.totalorder %s23, 0
      %p108 = por %p106, %p107
      %p109 = scmp.ne.s32.totalorder %s95, %s96
      %p110 = scmp.eq.s32.totalorder %s24, 8
      %p111 = por %p109, %p110
      %p113 = scmp.ne.s32.totalorder %s96, %s112
      %p114 = scmp.eq.s32.totalorder %s24, 0
      %p115 = por %p113, %p114
      %s116 = ssub.s32 %s25, %s37
      %p117 = scmp.eq.s32.totalorder %s116, 0
      %s119 = sadd.s32 %s118, 1
      %s120 = scalar_select %p117, %s118, %s119
      %p123 = pneg %p117
      %p124 = scmp.eq.s32.totalorder %s18, 8
      %p125 = por %p123, %p124
      %p126 = scmp.ne.s32.totalorder %s118, %s121
      %p127 = scmp.eq.s32.totalorder %s18, 0
      %p128 = por %p126, %p127
      %p129 = scmp.ne.s32.totalorder %s118, %s121
      %p130 = scmp.eq.s32.totalorder %s23, 8
      %p131 = por %p129, %p130
      %p132 = scmp.ne.s32.totalorder %s121, %s122
      %p133 = scmp.eq.s32.totalorder %s23, 0
      %p134 = por %p132, %p133
      %p135 = scmp.ne.s32.totalorder %s121, %s122
      %p136 = scmp.eq.s32.totalorder %s24, 8
      %p137 = por %p135, %p136
      %p139 = scmp.ne.s32.totalorder %s122, %s138
      %p140 = scmp.eq.s32.totalorder %s24, 0
      %p141 = por %p139, %p140
      %s142 = ssub.s32 %s25, %s37
      %p143 = scmp.eq.s32.totalorder %s142, 0
      %s145 = sadd.s32 %s144, 1
      %s146 = scalar_select %p143, %s144, %s145
      %p149 = pneg %p143
      %p150 = scmp.eq.s32.totalorder %s18, 8
      %p151 = por %p149, %p150
      %p152 = scmp.ne.s32.totalorder %s144, %s147
      %p153 = scmp.eq.s32.totalorder %s18, 0
      %p154 = por %p152, %p153
      %p155 = scmp.ne.s32.totalorder %s144, %s147
      %p156 = scmp.eq.s32.totalorder %s23, 8
      %p157 = por %p155, %p156
      %p158 = scmp.ne.s32.totalorder %s147, %s148
      %p159 = scmp.eq.s32.totalorder %s23, 0
      %p160 = por %p158, %p159
      %p161 = scmp.ne.s32.totalorder %s147, %s148
      %p162 = scmp.eq.s32.totalorder %s24, 8
      %p163 = por %p161, %p162
      %p165 = scmp.ne.s32.totalorder %s148, %s164
      %p166 = scmp.eq.s32.totalorder %s24, 0
      %p167 = por %p165, %p166
      %s168 = ssub.s32 %s25, %s37
      %p169 = scmp.eq.s32.totalorder %s168, 0
      %s171 = sadd.s32 %s170, 1
      %s172 = scalar_select %p169, %s170, %s171
      %p175 = pneg %p169
      %p176 = scmp.eq.s32.totalorder %s18, 8
      %p177 = por %p175, %p176
      %p178 = scmp.ne.s32.totalorder %s170, %s173
      %p179 = scmp.eq.s32.totalorder %s18, 0
      %p180 = por %p178, %p179
      %p181 = scmp.ne.s32.totalorder %s170, %s173
      %p182 = scmp.eq.s32.totalorder %s23, 8
      %p183 = por %p181, %p182
      %p184 = scmp.ne.s32.totalorder %s173, %s174
      %p185 = scmp.eq.s32.totalorder %s23, 0
      %p186 = por %p184, %p185
      %p187 = scmp.ne.s32.totalorder %s173, %s174
      %p188 = scmp.eq.s32.totalorder %s24, 8
      %p189 = por %p187, %p188
      %p191 = scmp.ne.s32.totalorder %s174, %s190
      %p192 = scmp.eq.s32.totalorder %s24, 0
      %p193 = por %p191, %p192
      %p194 = scmp.le.s32.totalorder 1, %s18
      %p195 = scmp.lt.s32.totalorder %s18, 10
      %p196 = pnand %p194, %p195
      %p197 = pneg %p196
      // Predicated region
      $region9: #{tpu_custom_call.1} parent=5 // pred_check
        _
      $region10: #{tpu_custom_call.1} parent=5 // pred_check_branch
        %199 = sbr.rel (%p196) target = $region12
      $region11: #{tpu_custom_call.1} parent=5 // pred_region
        %s200 = ssub.s32 %s18, 1
      $region12: #{tpu_custom_call.1} parent=5 // pred_fallthru
        _
      %p201 = scmp.lt.s32.totalorder %s18, 9
      // Predicated region
      $region13: #{tpu_custom_call.1} parent=5 // pred_check
        %p202 = pneg %p201
      $region14: #{tpu_custom_call.1} parent=5 // pred_check_branch
        %204 = sbr.rel (%p202) target = $region16
      $region15: #{tpu_custom_call.1} parent=5 // pred_region
        // Predicated region
        $region17: #{tpu_custom_call.1} parent=15 // pred_check
          %p205 = pneg %p50
        $region18: #{tpu_custom_call.1} parent=15 // pred_check_branch
          %207 = sbr.rel (%p205) target = $region20
        $region19: #{tpu_custom_call.1} parent=15 // pred_region
          %p208 = scmp.lt.s32.totalorder %s25, 2
          %s209 = scalar_select %p208, %s25, 2
          %s210 = smul.addr %s209, 8
          %s211 = scalar_lea.vmem %s0, %s210
        $region20: #{tpu_custom_call.1} parent=15 // pred_fallthru
          _
        // Predicated region
        $region21: #{tpu_custom_call.1} parent=15 // pred_check
          %p212 = pneg %p76
        $region22: #{tpu_custom_call.1} parent=15 // pred_check_branch
          %214 = sbr.rel (%p212) target = $region24
        $region23: #{tpu_custom_call.1} parent=15 // pred_region
          %s215 = smul.u32 16, %s26
          %p216 = scmp.lt.s32.totalorder %s215, 47
          %s217 = scalar_select %p216, %s215, 47
          %s218 = smul.addr %s217, 8
          %s219 = scalar_lea.vmem %s1, %s218
          %s220 = smul.u32 16, %s26
        $region24: #{tpu_custom_call.1} parent=15 // pred_fallthru
          _
        // Predicated region
        $region25: #{tpu_custom_call.1} parent=15 // pred_check
          %p221 = pneg %p102
        $region26: #{tpu_custom_call.1} parent=15 // pred_check_branch
          %223 = sbr.rel (%p221) target = $region28
        $region27: #{tpu_custom_call.1} parent=15 // pred_region
          %p224 = scmp.lt.s32.totalorder %s26, 2
          %s225 = scalar_select %p224, %s26, 2
          %s226 = scalar_lea.vmem %s2, %s225
        $region28: #{tpu_custom_call.1} parent=15 // pred_fallthru
          _
        // Predicated region
        $region29: #{tpu_custom_call.1} parent=15 // pred_check
          %p227 = pneg %p128
        $region30: #{tpu_custom_call.1} parent=15 // pred_check_branch
          %229 = sbr.rel (%p227) target = $region32
        $region31: #{tpu_custom_call.1} parent=15 // pred_region
          %p230 = scmp.lt.s32.totalorder %s25, 2
          %s231 = scalar_select %p230, %s25, 2
          %s232 = smul.addr %s231, 8
          %s233 = scalar_lea.vmem %s3, %s232
        $region32: #{tpu_custom_call.1} parent=15 // pred_fallthru
          _
      $region16: #{tpu_custom_call.1} parent=5 // pred_fallthru
        _
      %p234 = scmp.le.s32.totalorder 1, %s18
      %p235 = scmp.lt.s32.totalorder %s18, 10
      %p236 = pnand %p234, %p235
      %p237 = pneg %p236
      // Predicated region
      $region33: #{tpu_custom_call.1} parent=5 // pred_check
        _
      $region34: #{tpu_custom_call.1} parent=5 // pred_check_branch
        %239 = sbr.rel (%p236) target = $region36
      $region35: #{tpu_custom_call.1} parent=5 // pred_region
        %s240 = ssub.s32 %s18, 1
        %p241 = scmp.lt.s32.totalorder %s27, 2
        %s242 = scalar_select %p241, %s27, 2
        %s243 = smul.addr %s242, 8
        %s244 = scalar_lea.vmem %s0, %s243
        %p245 = pneg %p56
        %p246 = pneg %p53
        %s247 = smul.u32 16, %s28
        %p248 = scmp.lt.s32.totalorder %s247, 47
        %s249 = scalar_select %p248, %s247, 47
        %s250 = smul.addr %s249, 8
        %s251 = scalar_lea.vmem %s1, %s250
        %p252 = pneg %p82
        %p253 = pneg %p79
        %p254 = scmp.lt.s32.totalorder %s28, 2
        %s255 = scalar_select %p254, %s28, 2
        %s256 = scalar_lea.vmem %s2, %s255
        %p257 = pneg %p108
        %p258 = pneg %p105
        %p259 = scmp.lt.s32.totalorder %s27, 2
        %s260 = scalar_select %p259, %s27, 2
        %s261 = smul.addr %s260, 8
        %s262 = scalar_lea.vmem %s3, %s261
        %p263 = pneg %p134
        %p264 = pneg %p131
        %p265 = pneg %p160
        %p266 = pneg %p157
        %s267 = sand.u32 %s147, 1
        %s268 = scalar_lea.sflag [#allocation7], %s267
        %s269 = sand.u32 %s147, 1
        %s270 = smul.addr %s269, 8
        %s271 = scalar_lea.vmem [#allocation6], %s270
        %p272 = pneg %p186
        %p273 = pneg %p183
        %s274 = sand.u32 %s173, 1
        %s275 = scalar_lea.sflag [#allocation9], %s274
        %s276 = sand.u32 %s173, 1
        %s277 = smul.addr %s276, 8
        %s278 = scalar_lea.vmem [#allocation8], %s277
        %p279 = scmp.lt.s32.totalorder %s27, 2
        %s280 = scalar_select %p279, %s27, 2
        %s281 = smul.addr %s280, 8
        %s282 = scalar_lea.vmem %s0, %s281
        %s283 = smul.u32 16, %s28
        %p284 = scmp.lt.s32.totalorder %s283, 47
        %s285 = scalar_select %p284, %s283, 47
        %s286 = smul.addr %s285, 8
        %s287 = scalar_lea.vmem %s1, %s286
        %s288 = smul.u32 16, %s28
        %p289 = scmp.lt.s32.totalorder %s28, 2
        %s290 = scalar_select %p289, %s28, 2
        %s291 = scalar_lea.vmem %s2, %s290
        %p292 = scmp.lt.s32.totalorder %s27, 2
        %s293 = scalar_select %p292, %s27, 2
        %s294 = smul.addr %s293, 8
        %s295 = scalar_lea.vmem %s3, %s294
        %p296 = scmp.eq.s32.totalorder %s28, 0
        // Predicated region
        $region37: #{tpu_custom_call.1} parent=35 // pred_check
          %p297 = pneg %p296
        $region38: #{tpu_custom_call.1} parent=35 // pred_check_branch
          %299 = sbr.rel (%p297) target = $region40
        $region39: #{tpu_custom_call.1} parent=35 // pred_region
          %vm300 = vcmask 7168
          %301 = vst.msk [vmem:[#allocation2] sm:$0xff] %vm300, -inf
          %302 = vst.msk [vmem:[#allocation3] sm:$0xff] %vm300, 0.0
          %303 = vst.msk [vmem:[#allocation4] sm:$0xff] %vm300, 0.0
          %304 = vst.msk [vmem:[#allocation5] sm:$0xff] %vm300, 0
        $region40: #{tpu_custom_call.1} parent=35 // pred_fallthru
          _
        %v305 = vld [vmem:[%s282] sm:$0xff]
        %v306 = vld [vmem:[%s287] sm:$0xff]
        %v307 = vld [vmem:[%s287 + $0x8] sm:$0xff]
        %v308 = vld [vmem:[%s287 + $0x10] sm:$0xff]
        %v309 = vld [vmem:[%s287 + $0x18] sm:$0xff]
        %v310 = vld [vmem:[%s287 + $0x20] sm:$0xff]
        %v311 = vld [vmem:[%s287 + $0x28] sm:$0xff]
        %v312 = vld [vmem:[%s287 + $0x30] sm:$0xff]
        %v313 = vld [vmem:[%s287 + $0x38] sm:$0xff]
        %v314 = vld [vmem:[%s287 + $0x40] sm:$0xff]
        %v315 = vld [vmem:[%s287 + $0x48] sm:$0xff]
        %v316 = vld [vmem:[%s287 + $0x50] sm:$0xff]
        %v317 = vld [vmem:[%s287 + $0x58] sm:$0xff]
        %v318 = vld [vmem:[%s287 + $0x60] sm:$0xff]
        %v319 = vld [vmem:[%s287 + $0x68] sm:$0xff]
        %v320 = vld [vmem:[%s287 + $0x70] sm:$0xff]
        %v321 = vld [vmem:[%s287 + $0x78] sm:$0xff]
        %v322 = vld [vmem:[%s291] sm:$0x1]
        %v324 = vlaneseq
        %v325 = vshrl.u32 %v324, 7
        %v326 = vsub.s32 0, %v325
        %v327 = vrot.slane %v322, %v326
        %vm329 = vcmask 785408
        %v331 = vsel %vm329, %v305, 0
        %v334 = vsel %vm329, %v306, 0
        %v337 = vsel %vm329, %v307, 0
        %v340 = vsel %vm329, %v308, 0
        %v343 = vsel %vm329, %v309, 0
        %v346 = vsel %vm329, %v310, 0
        %v349 = vsel %vm329, %v311, 0
        %v352 = vsel %vm329, %v312, 0
        %v355 = vsel %vm329, %v313, 0
        %v358 = vsel %vm329, %v314, 0
        %v361 = vsel %vm329, %v315, 0
        %v364 = vsel %vm329, %v316, 0
        %v367 = vsel %vm329, %v317, 0
        %v370 = vsel %vm329, %v318, 0
        %v373 = vsel %vm329, %v319, 0
        %v376 = vsel %vm329, %v320, 0
        %v379 = vsel %vm329, %v321, 0
        %381 = vmatprep.subr.mxu0 0.0
        %382 = vmatpush1.xpose.msra.mxu0 %v379
        %383 = vmatprep.subr.mxu0 0.0
        %384 = vmatpush1.xpose.msra.mxu0 %v376
        %385 = vmatprep.subr.mxu0 0.0
        %386 = vmatpush1.xpose.msra.mxu0 %v373
        %387 = vmatprep.subr.mxu0 0.0
        %388 = vmatpush1.xpose.msra.mxu0 %v370
        %389 = vmatprep.subr.mxu0 0.0
        %390 = vmatpush1.xpose.msra.mxu0 %v367
        %391 = vmatprep.subr.mxu0 0.0
        %392 = vmatpush1.xpose.msra.mxu0 %v364
        %393 = vmatprep.subr.mxu0 0.0
        %394 = vmatpush1.xpose.msra.mxu0 %v361
        %395 = vmatprep.subr.mxu0 0.0
        %396 = vmatpush1.xpose.msra.mxu0 %v358
        %397 = vmatprep.subr.mxu0 0.0
        %398 = vmatpush1.xpose.msra.mxu0 %v355
        %399 = vmatprep.subr.mxu0 0.0
        %400 = vmatpush1.xpose.msra.mxu0 %v352
        %401 = vmatprep.subr.mxu0 0.0
        %402 = vmatpush1.xpose.msra.mxu0 %v349
        %403 = vmatprep.subr.mxu0 0.0
        %404 = vmatpush1.xpose.msra.mxu0 %v346
        %405 = vmatprep.subr.mxu0 0.0
        %406 = vmatpush1.xpose.msra.mxu0 %v343
        %407 = vmatprep.subr.mxu0 0.0
        %408 = vmatpush1.xpose.msra.mxu0 %v340
        %409 = vmatprep.subr.mxu0 0.0
        %410 = vmatpush1.xpose.msra.mxu0 %v337
        %411 = vmatprep.subr.mxu0 0.0
        %412 = vmatpush1.xpose.msra.mxu0 %v334
        %413 = vmatprep.subr.mxu0 0.0
        %414 = vmatpush2.xpose.msra.mxu0 0.0
        %415 = vmatprep.subr.mxu0 0.0
        %416 = vmatpush2.xpose.msra.mxu0 0.0
        %417 = vmatprep.subr.mxu0 0.0
        %418 = vmatpush2.xpose.msra.mxu0 0.0
        %419 = vmatprep.subr.mxu0 0.0
        %420 = vmatpush2.xpose.msra.mxu0 0.0
        %421 = vmatprep.subr.mxu0 0.0
        %422 = vmatpush2.xpose.msra.mxu0 0.0
        %423 = vmatprep.subr.mxu0 0.0
        %424 = vmatpush2.xpose.msra.mxu0 0.0
        %425 = vmatprep.subr.mxu0 0.0
        %426 = vmatpush2.xpose.msra.mxu0 0.0
        %427 = vmatprep.subr.mxu0 0.0
        %428 = vmatpush2.xpose.msra.mxu0 0.0
        %429 = vmatprep.subr.mxu0 0.0
        %430 = vmatpush2.xpose.msra.mxu0 0.0
        %431 = vmatprep.subr.mxu0 0.0
        %432 = vmatpush2.xpose.msra.mxu0 0.0
        %433 = vmatprep.subr.mxu0 0.0
        %434 = vmatpush2.xpose.msra.mxu0 0.0
        %435 = vmatprep.subr.mxu0 0.0
        %436 = vmatpush2.xpose.msra.mxu0 0.0
        %437 = vmatprep.subr.mxu0 0.0
        %438 = vmatpush2.xpose.msra.mxu0 0.0
        %439 = vmatprep.subr.mxu0 0.0
        %440 = vmatpush2.xpose.msra.mxu0 0.0
        %441 = vmatprep.subr.mxu0 0.0
        %442 = vmatpush2.xpose.msra.mxu0 0.0
        %443 = vmatprep.subr.mxu0 0.0
        %444 = vmatpush2.xpose.msra.mxu0 0.0
        %445 = vmatprep.mubr.f32.mxu0 0.0
        %446 = vmatmul.mubr.f32.gmra.mxu0 %v331
        %v447 = vpop.f32.mrf.mxu0
        %v448 = vadd.f32 %v327, %v447
        %v449 = vpop.f32.mrf.mxu0
        %450 = vdwg.mxu0
        %v451 = vlaneseq
        %v452 = vand.u32 %v451, 127
        %s453 = smul.u32 %s28, 128
        %v454 = vstv %s453
        %v455 = vadd.s32 %v452, %v454
        %vm456 = vcmp.lt.s32.totalorder %v455, 300
        %v457 = vsel %vm456, %v448, -inf
        %v458 = vld [vmem:[%s295] sm:$0xff]
        %v459 = vld [vmem:[#allocation4] sm:$0xff]
        %460 = vset.pattern.permute.xlu0 0
        %461 = vperm.xlu0 %460, %v458
        %v462 = vpop.permute.xlu0 %461
        %vm463 = vcmp.eq.s32.totalorder %v455, %v462
        %v464 = vsel %vm463, %v457, 0.0
        %465 = vadd.xlane.f32.xlu0 %v464
        %v466 = vpop.xlane.xlu0 %465
        %v467 = vadd.f32 %v459, %v466
        %vm468 = vcmask 7168
        %469 = vst.msk [vmem:[#allocation4] sm:$0xff] %vm468, %v467
        %470 = vmax.xlane.f32.xlu0 %v457
        %v471 = vpop.xlane.xlu0 %470
        %vm472 = vcmp.ge.f32.partialorder %v457, %v471
        %v473 = vsel %vm472, %v455, 2147483647
        %v474 = vand.u32 %v473, 65535
        %v475 = vshra.s32 %v473, 16
        %v476 = vcvt.s32.f32 %v474
        %v477 = vcvt.s32.f32 %v475
        %478 = vmin.xlane.f32.xlu0 %v477
        %v479 = vpop.xlane.xlu0 %478
        %vm480 = vcmp.eq.f32.partialorder %v477, %v479
        %v481 = vsel %vm480, %v476, inf
        %482 = vmin.xlane.f32.xlu0 %v481
        %v483 = vpop.xlane.xlu0 %482
        %v484 = vcvt.f32.s32 %v483
        %v485 = vcvt.f32.s32 %v479
        %v486 = vshll.u32 %v485, 16
        %v487 = vadd.s32 %v486, %v484
        %v488 = vld [vmem:[#allocation2] sm:$0xff]
        %v489 = vmax.f32 %v488, %v471
        %v490 = vld [vmem:[#allocation3] sm:$0xff]
        %v491 = vsub.f32 %v488, %v489
        %v492 = vmul.f32 %v491, 1.442695
        %v493 = vpow.pop %v492
        %v494 = vmul.f32 %v490, %v493
        %496 = vset.pattern.permute.xlu0 0
        %497 = vperm.xlu0 %496, %v489
        %v498 = vpop.permute.xlu0 %497
        %v500 = vsub.f32 %v457, %v498
        %v501 = vmul.f32 %v500, 1.442695
        %v502 = vpow.pop %v501
        %503 = vadd.xlane.f32.xlu0 %v502
        %v504 = vpop.xlane.xlu0 %503
        %v505 = vadd.f32 %v494, %v504
        %506 = vst.msk [vmem:[#allocation3] sm:$0xff] %vm468, %v505
        %vm507 = vcmp.gt.f32.partialorder %v471, %v488
        %v508 = vld [vmem:[#allocation5] sm:$0xff]
        %v509 = vsel %vm507, %v487, %v508
        %510 = vst.msk [vmem:[#allocation5] sm:$0xff] %vm468, %v509
        %511 = vst.msk [vmem:[#allocation2] sm:$0xff] %vm468, %v489
        %p512 = scmp.eq.s32.totalorder %s28, 2
        // Predicated region
        $region41: #{tpu_custom_call.1} parent=35 // pred_check
          %p513 = pneg %p512
        $region42: #{tpu_custom_call.1} parent=35 // pred_check_branch
          %515 = sbr.rel (%p513) target = $region44
        $region43: #{tpu_custom_call.1} parent=35 // pred_region
          %v516 = vld [vmem:[#allocation2] sm:$0xff]
          %v517 = vld [vmem:[#allocation3] sm:$0xff]
          %v518 = vlog2.pop %v517
          %v519 = vmul.f32 %v518, 0.6931472
          %v520 = vadd.f32 %v516, %v519
          %v521 = vld [vmem:[#allocation4] sm:$0xff]
          %v522 = vsub.f32 %v520, %v521
          %v523 = vld [vmem:[#allocation5] sm:$0xff]
          %vm524 = vcmp.eq.s32.totalorder %v523, %v458
          %v525 = vsel %vm524, 1, 0
          %v526 = vcvt.s32.f32 %v525
          %528 = vset.pattern.permute.xlu0 0
          %529 = vperm.xlu0 %528, %v522
          %v530 = vpop.permute.xlu0 %529
          %532 = vst [vmem:[%s271] sm:$0xff] %v530
          %534 = vset.pattern.permute.xlu0 0
          %535 = vperm.xlu0 %534, %v526
          %v536 = vpop.permute.xlu0 %535
          %538 = vst [vmem:[%s278] sm:$0xff] %v536
        $region44: #{tpu_custom_call.1} parent=35 // pred_fallthru
          _
        %s539 = sand.u32 %s147, 1
        %s540 = scalar_lea.sflag [#allocation7], %s539
        %s541 = sand.u32 %s147, 1
        %s542 = smul.addr %s541, 8
        %s543 = scalar_lea.vmem [#allocation6], %s542
        %s544 = sand.u32 %s173, 1
        %s545 = scalar_lea.sflag [#allocation9], %s544
        %s546 = sand.u32 %s173, 1
        %s547 = smul.addr %s546, 8
        %s548 = scalar_lea.vmem [#allocation8], %s547
        // Predicated region
        $region45: #{tpu_custom_call.1} parent=35 // pred_check
          %p549 = pneg %p157
        $region46: #{tpu_custom_call.1} parent=35 // pred_check_branch
          %551 = sbr.rel (%p549) target = $region48
        $region47: #{tpu_custom_call.1} parent=35 // pred_region
          %s553 = ssub.s32 128, 128
          %554 = vsyncadd %s540, %s553
          %s555 = smul.addr %s27, 128
          %s556 = scalar_lea.hbm %s4, %s555
          %s558 = sshll.u32 %s543, 4
          %s559 = int_to_ptr.vmem [resolvable:$true] %s558
          %561 = dma.vmem_to_hbm [thread:$0]  %s559, 128, %s556, %s540
        $region48: #{tpu_custom_call.1} parent=35 // pred_fallthru
          _
        // Predicated region
        $region49: #{tpu_custom_call.1} parent=35 // pred_check
          %p562 = pneg %p183
        $region50: #{tpu_custom_call.1} parent=35 // pred_check_branch
          %564 = sbr.rel (%p562) target = $region52
        $region51: #{tpu_custom_call.1} parent=35 // pred_region
          %s566 = ssub.s32 128, 128
          %567 = vsyncadd %s545, %s566
          %s568 = smul.addr %s27, 128
          %s569 = scalar_lea.hbm %s5, %s568
          %s571 = sshll.u32 %s548, 4
          %s572 = int_to_ptr.vmem [resolvable:$true] %s571
          %574 = dma.vmem_to_hbm [thread:$0]  %s572, 128, %s569, %s545
        $region52: #{tpu_custom_call.1} parent=35 // pred_fallthru
          _
      $region36: #{tpu_custom_call.1} parent=5 // pred_fallthru
        _
      %p575 = scmp.le.s32.totalorder 2, %s18
      // Predicated region
      $region53: #{tpu_custom_call.1} parent=5 // pred_check
        %p576 = pneg %p575
      $region54: #{tpu_custom_call.1} parent=5 // pred_check_branch
        %578 = sbr.rel (%p576) target = $region56
      $region55: #{tpu_custom_call.1} parent=5 // pred_region
        %s579 = ssub.s32 %s18, 2
        // Predicated region
        $region57: #{tpu_custom_call.1} parent=55 // pred_check
          %p580 = pneg %p163
        $region58: #{tpu_custom_call.1} parent=55 // pred_check_branch
          %582 = sbr.rel (%p580) target = $region60
        $region59: #{tpu_custom_call.1} parent=55 // pred_region
          %s583 = sand.u32 %s148, 1
          %s584 = scalar_lea.sflag [#allocation7], %s583
          %s585 = sand.u32 %s148, 1
          %s586 = smul.addr %s585, 8
          %s587 = scalar_lea.vmem [#allocation6], %s586
          %588 = dma.done %s584, 128
        $region60: #{tpu_custom_call.1} parent=55 // pred_fallthru
          _
        // Predicated region
        $region61: #{tpu_custom_call.1} parent=55 // pred_check
          %p589 = pneg %p189
        $region62: #{tpu_custom_call.1} parent=55 // pred_check_branch
          %591 = sbr.rel (%p589) target = $region64
        $region63: #{tpu_custom_call.1} parent=55 // pred_region
          %s592 = sand.u32 %s174, 1
          %s593 = scalar_lea.sflag [#allocation9], %s592
          %s594 = sand.u32 %s174, 1
          %s595 = smul.addr %s594, 8
          %s596 = scalar_lea.vmem [#allocation8], %s595
          %597 = dma.done %s593, 128
        $region64: #{tpu_custom_call.1} parent=55 // pred_fallthru
          _
      $region56: #{tpu_custom_call.1} parent=5 // pred_fallthru
        _
    $region6: #{tpu_custom_call.1} parent=1 // loop_footer
      %s22 = sadd.s32 1, %s18
    $region7: #{tpu_custom_call.1} parent=1 // loop_footer_branch
      %17 = sbr.rel target = $region3
    $region8: #{tpu_custom_call.1} parent=1 // loop_exit
      _
    %598 = vsyncpa [#allocation7], 1
    %s599 = scalar_lea.sflag [#allocation7], 1
    %600 = vsyncpa %s599, 1
    %601 = vsyncpa [#allocation9], 1
    %s602 = scalar_lea.sflag [#allocation9], 1
    %603 = vsyncpa %s602, 1

</llo_original>
